<compile_context>
chip_gen: v7x
topology: tpu7x:2x2x1
jax: 0.10.0
libtpu: 0.0.40
codegen_flags: <defaults>
</compile_context>

<pallas_src>
import functools

import jax
import jax.numpy as jnp
from jax import lax
from jax.experimental import pallas as pl
from jax.experimental.pallas import tpu as pltpu


def _siglip_attention_kernel(x_ref, wqkv_ref, bqkv_ref, wo_ref, bo_ref,
                             out_ref, probs_ref, acc_ref,
                             *, head_dim, compute_dtype):
    h = pl.program_id(1)
    last_h = pl.num_programs(1) - 1
    D = head_dim

    @pl.when(h == 0)
    def _init():
        acc_ref[...] = jnp.zeros_like(acc_ref)

    # Fused per-head QKV projection: (S, E) @ (E, 3D) -> (S, 3D), f32 accumulation.
    # The 1/sqrt(D) scale is already folded into the q columns / q bias.
    x = x_ref[0].astype(compute_dtype)                       # (S, E)
    w_qkv = wqkv_ref[0]                                      # (E, 3D), pre-transposed
    qkv = jnp.dot(x, w_qkv, preferred_element_type=jnp.float32) + bqkv_ref[0]

    q = qkv[:, 0:D]                                          # (S, D), already scaled
    k = qkv[:, D:2 * D]                                      # (S, D)
    v = qkv[:, 2 * D:3 * D]                                  # (S, D)

    # scores (S, S): contract head_dim without an explicit transpose of k.
    scores = lax.dot_general(
        q.astype(compute_dtype), k.astype(compute_dtype),
        dimension_numbers=(((1,), (1,)), ((), ())),
        preferred_element_type=jnp.float32)

    # softmax in float32 (matches dtype=torch.float32 in the reference)
    m = jnp.max(scores, axis=-1, keepdims=True)
    e = jnp.exp(scores - m)
    denom = jnp.sum(e, axis=-1, keepdims=True)
    probs = e * pl.reciprocal(denom, approx=True)            # (S, S) f32
    probs_ref[0, 0] = probs.astype(probs_ref.dtype)
    # TODO(synk): attention_dropout=0.0 (eval mode) so dropout is a no-op; omitted.

    # context for this head and its contribution to the output projection:
    #   out = sum_h ctx_h @ WoT[h*D:(h+1)*D, :] + bo
    ctx = jnp.dot(probs.astype(compute_dtype), v.astype(compute_dtype),
                  preferred_element_type=jnp.float32)        # (S, D)
    acc_ref[...] += jnp.dot(ctx.astype(compute_dtype), wo_ref[0],
                            preferred_element_type=jnp.float32)

    @pl.when(h == last_h)
    def _finalize():
        out_ref[0] = (acc_ref[...] + bo_ref[...]).astype(out_ref.dtype)


def siglip_attention(hidden_states, params, num_heads, *,
                     compute_dtype=jnp.float32, probs_dtype=jnp.float32):
    """hidden_states: (B, S, E). params: PyTorch-convention q/k/v/out weights & biases."""
    B, S, E = hidden_states.shape
    H = num_heads
    D = E // H
    scale = D ** (-0.5)

    # --- one-time wrapper-side packing (free relative to the kernel) -------------
    # PyTorch Linear is y = x @ W.T + b  ->  pre-transpose so the kernel does x @ W.
    wqT = params["wq"].T * scale          # fold scale into the q projection
    wkT = params["wk"].T
    wvT = params["wv"].T
    woT = params["wo"].T
    bq = params["bq"] * scale
    bk = params["bk"]
    bv = params["bv"]
    bo = params["bo"].reshape(1, E)

    def per_head_cols(w):                 # (E, E) -> (H, E, D) head-major columns
        return w.reshape(E, H, D).transpose(1, 0, 2)

    # Packed per-head fused QKV weight: (H, E, 3D) with columns [q_h | k_h | v_h].
    wqkv = jnp.concatenate([per_head_cols(wqT),
                            per_head_cols(wkT),
                            per_head_cols(wvT)], axis=-1).astype(compute_dtype)
    bqkv = jnp.concatenate([bq.reshape(H, 1, D),
                            bk.reshape(H, 1, D),
                            bv.reshape(H, 1, D)], axis=-1)            # (H, 1, 3D) f32
    # Out-projection rows belonging to each head: (H, D, E).
    woT_h = woT.reshape(H, D, E).astype(compute_dtype)

    kernel = functools.partial(_siglip_attention_kernel,
                               head_dim=D, compute_dtype=compute_dtype)

    # Advisory cost estimate for the XLA scheduler.
    w_itemsize = jnp.dtype(compute_dtype).itemsize
    flops = 8 * B * S * E * E + 4 * B * H * S * S * D
    transcendentals = B * H * S * S
    bytes_accessed = (
        hidden_states.size * hidden_states.dtype.itemsize          # x read
        + (wqkv.size + woT_h.size) * w_itemsize                     # weights
        + (bqkv.size + bo.size) * 4                                 # biases
        + B * S * E * hidden_states.dtype.itemsize                  # out write
        + B * H * S * S * jnp.dtype(probs_dtype).itemsize)          # probs write

    out, probs = pl.pallas_call(
        kernel,
        out_shape=(
            jax.ShapeDtypeStruct((B, S, E), hidden_states.dtype),
            jax.ShapeDtypeStruct((B, H, S, S), probs_dtype),
        ),
        grid=(B, H),
        in_specs=[
            pl.BlockSpec((1, S, E), lambda b, h: (b, 0, 0)),        # x (resident across h)
            pl.BlockSpec((1, E, 3 * D), lambda b, h: (h, 0, 0)),    # packed qkv weight (per head)
            pl.BlockSpec((1, 1, 3 * D), lambda b, h: (h, 0, 0)),    # packed qkv bias (per head)
            pl.BlockSpec((1, D, E), lambda b, h: (h, 0, 0)),        # out-proj rows (per head)
            pl.BlockSpec((1, E), lambda b, h: (0, 0)),              # out-proj bias
        ],
        out_specs=(
            pl.BlockSpec((1, S, E), lambda b, h: (b, 0, 0)),        # accumulator-style output
            pl.BlockSpec((1, 1, S, S), lambda b, h: (b, h, 0, 0)),  # lane-dense per-head probs
        ),
        scratch_shapes=[pltpu.VMEM((S, E), jnp.float32)],           # out-proj accumulator
        compiler_params=pltpu.CompilerParams(
            dimension_semantics=("parallel", "arbitrary"),
            vmem_limit_bytes=48 * 1024 * 1024),
        cost_estimate=pl.CostEstimate(flops=flops,
                                      transcendentals=transcendentals,
                                      bytes_accessed=bytes_accessed),
    )(hidden_states, wqkv, bqkv, woT_h, bo)
    return out, probs


def _reference(hidden_states, params, num_heads):
    """Plain-JAX re-implementation of the PyTorch forward, for verification."""
    B, S, E = hidden_states.shape
    D = E // num_heads
    scale = D ** (-0.5)

    def lin(x, w, b):
        return x @ w.T + b

    q = lin(hidden_states, params["wq"], params["bq"]).reshape(B, S, num_heads, D).transpose(0, 2, 1, 3)
    k = lin(hidden_states, params["wk"], params["bk"]).reshape(B, S, num_heads, D).transpose(0, 2, 1, 3)
    v = lin(hidden_states, params["wv"], params["bv"]).reshape(B, S, num_heads, D).transpose(0, 2, 1, 3)

    scores = jnp.einsum('bhqd,bhkd->bhqk', q, k) * scale
    probs = jax.nn.softmax(scores.astype(jnp.float32), axis=-1)
    ctx = jnp.einsum('bhqk,bhkd->bhqd', probs, v)
    ctx = ctx.transpose(0, 2, 1, 3).reshape(B, S, E)
    out = lin(ctx, params["wo"], params["bo"])
    return out, probs


if __name__ == "__main__":
    # Small config consistent with SiglipVisionConfig semantics.
    # NOTE: the reference forward's (buggy) shape check requires seq_length == head_dim,
    # so we pick seq = head_dim = 8.
    batch = 2
    hidden_size = 32          # embed_dim
    num_heads = 4             # head_dim = 8
    seq_len = 8

    key = jax.random.PRNGKey(0)
    keys = jax.random.split(key, 9)
    init = lambda k, shape: (jax.random.normal(k, shape, dtype=jnp.float32) * 0.02)

    params = {
        "wq": init(keys[0], (hidden_size, hidden_size)),
        "bq": init(keys[1], (hidden_size,)),
        "wk": init(keys[2], (hidden_size, hidden_size)),
        "bk": init(keys[3], (hidden_size,)),
        "wv": init(keys[4], (hidden_size, hidden_size)),
        "bv": init(keys[5], (hidden_size,)),
        "wo": init(keys[6], (hidden_size, hidden_size)),
        "bo": init(keys[7], (hidden_size,)),
    }
    x = jax.random.normal(keys[8], (batch, seq_len, hidden_size), dtype=jnp.float32)

    ref_out, ref_probs = _reference(x, params, num_heads)

    # Default (f32 matmuls, f32 softmax) — matches the PyTorch module's semantics.
    out, probs = siglip_attention(x, params, num_heads)
    out, probs = jax.block_until_ready((out, probs))
    assert out.shape == (batch, seq_len, hidden_size)
    assert probs.shape == (batch, num_heads, seq_len, seq_len)
    # Tolerance accounts for the approximate EUP reciprocal in the softmax denominator.
    assert jnp.allclose(out, ref_out, atol=5e-3, rtol=5e-3)
    assert jnp.allclose(probs, ref_probs, atol=5e-3, rtol=5e-3)

    # bf16 MXU path (bf16 weights/activations, f32 accumulation + f32 softmax).
    out_bf, probs_bf = siglip_attention(x, params, num_heads,
                                        compute_dtype=jnp.bfloat16)
    out_bf, probs_bf = jax.block_until_ready((out_bf, probs_bf))
    assert jnp.allclose(out_bf, ref_out, atol=5e-2, rtol=5e-2)
    assert jnp.allclose(probs_bf, ref_probs, atol=5e-2, rtol=5e-2)

    print("KERNEL_OK")
</pallas_src>

<mosaic_0001>
module attributes {stable_mosaic.version = 11 : i64} {
  func.func @_siglip_attention_kernel(%arg0: i32, %arg1: i32, %arg2: memref<1x8x32xf32, #tpu.memory_space<vmem>>, %arg3: memref<1x32x24xf32, #tpu.memory_space<vmem>>, %arg4: memref<1x1x24xf32, #tpu.memory_space<vmem>>, %arg5: memref<1x8x32xf32, #tpu.memory_space<vmem>>, %arg6: memref<1x32xf32, #tpu.memory_space<vmem>>, %arg7: memref<1x8x32xf32, #tpu.memory_space<vmem>>, %arg8: memref<1x1x8x8xf32, #tpu.memory_space<vmem>>, %arg9: memref<8x32xf32, #tpu.memory_space<vmem>>) attributes {dimension_semantics = [#tpu.dimension_semantics<parallel>, #tpu.dimension_semantics<arbitrary>], iteration_bounds = array<i64: 2, 4>, scalar_prefetch = 0 : i64, scratch_operands = 1 : i64, tpu.core_type = #tpu.core_type<tc>, window_params = [{transform_indices = @transform_0, window_bounds = array<i64: 1, 8, 32>}, {transform_indices = @transform_1, window_bounds = array<i64: 1, 32, 24>}, {transform_indices = @transform_2, window_bounds = array<i64: 1, 1, 24>}, {transform_indices = @transform_3, window_bounds = array<i64: 1, 8, 32>}, {pipeline_mode = #tpu.pipeline_mode<synchronous>, transform_indices = @transform_4, window_bounds = array<i64: 1, 32>}, {transform_indices = @transform_5, window_bounds = array<i64: 1, 8, 32>}, {transform_indices = @transform_6, window_bounds = array<i64: 1, 1, 8, 8>}]} {
    %c0_i32 = arith.constant 0 : i32
    %0 = arith.cmpi eq, %arg1, %c0_i32 : i32
    %1 = arith.extui %0 : i1 to i32
    %c0_i32_0 = arith.constant 0 : i32
    %2 = arith.cmpi ne, %1, %c0_i32_0 : i32
    scf.if %2 {
      %cst_26 = arith.constant 0.000000e+00 : f32
      %39 = vector.broadcast %cst_26 : f32 to vector<8x32xf32>
      %c0_27 = arith.constant 0 : index
      %c0_28 = arith.constant 0 : index
      %40 = vector.load %arg9[%c0_27, %c0_28] : memref<8x32xf32, #tpu.memory_space<vmem>>, vector<8x32xf32>
      tpu.vector_store %arg9[%c0_27, %c0_28], %39 {strides = array<i32>} : memref<8x32xf32, #tpu.memory_space<vmem>>, vector<8x32xf32>,
    } else {
    }
    %c0 = arith.constant 0 : index
    %c0_1 = arith.constant 0 : index
    %c0_2 = arith.constant 0 : index
    %3 = vector.load %arg2[%c0, %c0_1, %c0_2] : memref<1x8x32xf32, #tpu.memory_space<vmem>>, vector<1x8x32xf32>
    %4 = vector.shape_cast %3 : vector<1x8x32xf32> to vector<8x32xf32>
    %c0_3 = arith.constant 0 : index
    %c0_4 = arith.constant 0 : index
    %c0_5 = arith.constant 0 : index
    %5 = vector.load %arg3[%c0_3, %c0_4, %c0_5] : memref<1x32x24xf32, #tpu.memory_space<vmem>>, vector<1x32x24xf32>
    %6 = vector.shape_cast %5 : vector<1x32x24xf32> to vector<32x24xf32>
    %cst = arith.constant dense<0.000000e+00> : vector<8x24xf32>
    %7 = tpu.matmul %4, %6, %cst {dimension_numbers = #tpu.dot_dimension_numbers<[1], [0], [0], [1], [0, 0, 1, 1], [], []>} : vector<8x32xf32>, vector<32x24xf32>, vector<8x24xf32> -> vector<8x24xf32>
    %c0_6 = arith.constant 0 : index
    %c0_7 = arith.constant 0 : index
    %c0_8 = arith.constant 0 : index
    %8 = vector.load %arg4[%c0_6, %c0_7, %c0_8] : memref<1x1x24xf32, #tpu.memory_space<vmem>>, vector<1x1x24xf32>
    %9 = vector.shape_cast %8 : vector<1x1x24xf32> to vector<1x24xf32>
    %10 = vector.broadcast %9 : vector<1x24xf32> to vector<8x24xf32>
    %11 = arith.addf %7, %10 : vector<8x24xf32>
    %12 = vector.extract_strided_slice %11 {offsets = [0, 0], sizes = [8, 8], strides = [1, 1]} : vector<8x24xf32> to vector<8x8xf32>
    %13 = vector.extract_strided_slice %11 {offsets = [0, 8], sizes = [8, 8], strides = [1, 1]} : vector<8x24xf32> to vector<8x8xf32>
    %14 = vector.extract_strided_slice %11 {offsets = [0, 16], sizes = [8, 8], strides = [1, 1]} : vector<8x24xf32> to vector<8x8xf32>
    %cst_9 = arith.constant dense<0.000000e+00> : vector<8x8xf32>
    %15 = tpu.matmul %12, %13, %cst_9 {dimension_numbers = #tpu.dot_dimension_numbers<[1], [1], [0], [0], [0, 0, 1, 0], [], []>} : vector<8x8xf32>, vector<8x8xf32>, vector<8x8xf32> -> vector<8x8xf32>
    %cst_10 = arith.constant dense<0xFF800000> : vector<8xf32>
    %16 = vector.multi_reduction <maximumf>, %15, %cst_10 [1] : vector<8x8xf32> to vector<8xf32>
    %17 = vector.shape_cast %16 : vector<8xf32> to vector<8x1xf32>
    %18 = vector.broadcast %17 : vector<8x1xf32> to vector<8x8xf32>
    %19 = arith.subf %15, %18 : vector<8x8xf32>
    %20 = math.exp %19 : vector<8x8xf32>
    %cst_11 = arith.constant dense<0.000000e+00> : vector<8xf32>
    %21 = vector.multi_reduction <add>, %20, %cst_11 [1] : vector<8x8xf32> to vector<8xf32>
    %22 = vector.shape_cast %21 : vector<8xf32> to vector<8x1xf32>
    %23 = tpu.reciprocal %22 {approx = true} : vector<8x1xf32> -> vector<8x1xf32>
    %24 = vector.broadcast %23 : vector<8x1xf32> to vector<8x8xf32>
    %25 = arith.mulf %20, %24 : vector<8x8xf32>
    %c0_12 = arith.constant 0 : index
    %c0_13 = arith.constant 0 : index
    %c0_14 = arith.constant 0 : index
    %c0_15 = arith.constant 0 : index
    %26 = vector.load %arg8[%c0_12, %c0_13, %c0_14, %c0_15] : memref<1x1x8x8xf32, #tpu.memory_space<vmem>>, vector<1x1x8x8xf32>
    %27 = vector.shape_cast %26 : vector<1x1x8x8xf32> to vector<8x8xf32>
    %28 = vector.shape_cast %25 : vector<8x8xf32> to vector<1x1x8x8xf32>
    tpu.vector_store %arg8[%c0_12, %c0_13, %c0_14, %c0_15], %28 {strides = array<i32>} : memref<1x1x8x8xf32, #tpu.memory_space<vmem>>, vector<1x1x8x8xf32>,
    %cst_16 = arith.constant dense<0.000000e+00> : vector<8x8xf32>
    %29 = tpu.matmul %25, %14, %cst_16 {dimension_numbers = #tpu.dot_dimension_numbers<[1], [0], [0], [1], [0, 0, 1, 1], [], []>} : vector<8x8xf32>, vector<8x8xf32>, vector<8x8xf32> -> vector<8x8xf32>
    %c0_17 = arith.constant 0 : index
    %c0_18 = arith.constant 0 : index
    %30 = vector.load %arg9[%c0_17, %c0_18] : memref<8x32xf32, #tpu.memory_space<vmem>>, vector<8x32xf32>
    %c0_19 = arith.constant 0 : index
    %c0_20 = arith.constant 0 : index
    %c0_21 = arith.constant 0 : index
    %31 = vector.load %arg5[%c0_19, %c0_20, %c0_21] : memref<1x8x32xf32, #tpu.memory_space<vmem>>, vector<1x8x32xf32>
    %32 = vector.shape_cast %31 : vector<1x8x32xf32> to vector<8x32xf32>
    %cst_22 = arith.constant dense<0.000000e+00> : vector<8x32xf32>
    %33 = tpu.matmul %29, %32, %cst_22 {dimension_numbers = #tpu.dot_dimension_numbers<[1], [0], [0], [1], [0, 0, 1, 1], [], []>} : vector<8x8xf32>, vector<8x32xf32>, vector<8x32xf32> -> vector<8x32xf32>
    %34 = arith.addf %30, %33 : vector<8x32xf32>
    %c0_23 = arith.constant 0 : index
    %c0_24 = arith.constant 0 : index
    %35 = vector.load %arg9[%c0_23, %c0_24] : memref<8x32xf32, #tpu.memory_space<vmem>>, vector<8x32xf32>
    tpu.vector_store %arg9[%c0_23, %c0_24], %34 {strides = array<i32>} : memref<8x32xf32, #tpu.memory_space<vmem>>, vector<8x32xf32>,
    %c3_i32 = arith.constant 3 : i32
    %36 = arith.cmpi eq, %arg1, %c3_i32 : i32
    %37 = arith.extui %36 : i1 to i32
    %c0_i32_25 = arith.constant 0 : i32
    %38 = arith.cmpi ne, %37, %c0_i32_25 : i32
    scf.if %38 {
      %c0_26 = arith.constant 0 : index
      %c0_27 = arith.constant 0 : index
      %39 = vector.load %arg9[%c0_26, %c0_27] : memref<8x32xf32, #tpu.memory_space<vmem>>, vector<8x32xf32>
      %c0_28 = arith.constant 0 : index
      %c0_29 = arith.constant 0 : index
      %40 = vector.load %arg6[%c0_28, %c0_29] : memref<1x32xf32, #tpu.memory_space<vmem>>, vector<1x32xf32>
      %41 = vector.broadcast %40 : vector<1x32xf32> to vector<8x32xf32>
      %42 = arith.addf %39, %41 : vector<8x32xf32>
      %c0_30 = arith.constant 0 : index
      %c0_31 = arith.constant 0 : index
      %c0_32 = arith.constant 0 : index
      %43 = vector.load %arg7[%c0_30, %c0_31, %c0_32] : memref<1x8x32xf32, #tpu.memory_space<vmem>>, vector<1x8x32xf32>
      %44 = vector.shape_cast %43 : vector<1x8x32xf32> to vector<8x32xf32>
      %45 = vector.shape_cast %42 : vector<8x32xf32> to vector<1x8x32xf32>
      tpu.vector_store %arg7[%c0_30, %c0_31, %c0_32], %45 {strides = array<i32>} : memref<1x8x32xf32, #tpu.memory_space<vmem>>, vector<1x8x32xf32>,
    } else {
    }
    return
  }
  func.func @transform_0(%arg0: i32, %arg1: i32) -> (i32, i32, i32) {
    %c0_i32 = arith.constant 0 : i32
    %c0_i32_0 = arith.constant 0 : i32
    %c0_i32_1 = arith.constant 0 : i32
    return %arg0, %c0_i32, %c0_i32_0 : i32, i32, i32
  }
  func.func @transform_1(%arg0: i32, %arg1: i32) -> (i32, i32, i32) {
    %c0_i32 = arith.constant 0 : i32
    %c0_i32_0 = arith.constant 0 : i32
    %c0_i32_1 = arith.constant 0 : i32
    return %arg1, %c0_i32, %c0_i32_0 : i32, i32, i32
  }
  func.func @transform_2(%arg0: i32, %arg1: i32) -> (i32, i32, i32) {
    %c0_i32 = arith.constant 0 : i32
    %c0_i32_0 = arith.constant 0 : i32
    %c0_i32_1 = arith.constant 0 : i32
    return %arg1, %c0_i32, %c0_i32_0 : i32, i32, i32
  }
  func.func @transform_3(%arg0: i32, %arg1: i32) -> (i32, i32, i32) {
    %c0_i32 = arith.constant 0 : i32
    %c0_i32_0 = arith.constant 0 : i32
    %c0_i32_1 = arith.constant 0 : i32
    return %arg1, %c0_i32, %c0_i32_0 : i32, i32, i32
  }
  func.func @transform_4(%arg0: i32, %arg1: i32) -> (i32, i32) {
    %c0_i32 = arith.constant 0 : i32
    %c0_i32_0 = arith.constant 0 : i32
    %c0_i32_1 = arith.constant 0 : i32
    return %c0_i32, %c0_i32_0 : i32, i32
  }
  func.func @transform_5(%arg0: i32, %arg1: i32) -> (i32, i32, i32) {
    %c0_i32 = arith.constant 0 : i32
    %c0_i32_0 = arith.constant 0 : i32
    %c0_i32_1 = arith.constant 0 : i32
    return %arg0, %c0_i32, %c0_i32_0 : i32, i32, i32
  }
  func.func @transform_6(%arg0: i32, %arg1: i32) -> (i32, i32, i32, i32) {
    %c0_i32 = arith.constant 0 : i32
    %c0_i32_0 = arith.constant 0 : i32
    %c0_i32_1 = arith.constant 0 : i32
    return %arg0, %arg1, %c0_i32, %c0_i32_0 : i32, i32, i32, i32
  }
}

</mosaic_0001>

<llo_original>
// kernel: tpu_custom_call.1
$region0: #{tpu_custom_call.1}
  #allocation0 [shape = 'u32[]', space=smem, size = 0x4, offset = 0x4, fixed_abs, tag = 'smem constant byte address 0x4 - core index']
  #allocation1 [shape = 'u32[144,128]{1,0:T(1,128)}', space=vmem, size = 0x12000, scoped, tag = 'internal scratch']
  #allocation2 [shape = 'f32[8,32]{1,0:T(8,128)}', space=vmem, size = 0x1000, scoped, tag = 'scratch operand']
  %s0 = inlined_call_operand.vmem [shape: f32[2,8,32], index: 0, kind: input, shape index: {}]
  %s1 = inlined_call_operand.vmem [shape: f32[4,32,24], index: 1, kind: input, shape index: {}]
  %s2 = inlined_call_operand.vmem [shape: f32[4,1,24], index: 2, kind: input, shape index: {}]
  %s3 = inlined_call_operand.vmem [shape: f32[4,8,32], index: 3, kind: input, shape index: {}]
  %s4 = inlined_call_operand.vmem [shape: f32[1,32], index: 4, kind: input, shape index: {}]
  %s5 = inlined_call_operand.hbm [shape: f32[2,8,32], index: 5, kind: output, shape index: {0}]
  %s6 = inlined_call_operand.hbm [shape: f32[2,4,8,8], index: 6, kind: output, shape index: {1}]
  %7 = xla_tuple %s5, %s6
  %s8 = sld [smem:[#allocation0]]
  $region69: #{tpu_custom_call.1} parent=0
    _
  %s10 = ssub.s32 1, %s8
  %s11 = scalar_select 0, %s10, %s8
  $region1: #{tpu_custom_call.1} parent=0
    #allocation3 [shape = 'u8[8192]{0}', space=vmem, size = 0x2000, scoped, tag = 'output window, operand 0']
    #allocation4 [shape = 's32[2]{0}', space=sflag, size = 0x8, scoped, tag = 'scoped memory for tpu_custom_call.1']
    #allocation5 [shape = 'u8[8192]{0}', space=vmem, size = 0x2000, scoped, tag = 'output window, operand 1']
    #allocation6 [shape = 's32[2]{0}', space=sflag, size = 0x8, scoped, tag = 'scoped memory for tpu_custom_call.1']
    %12 = vsyncpa [#allocation4], 0
    %s13 = scalar_lea.sflag [#allocation4], 1
    %14 = vsyncpa %s13, 0
    %15 = vsyncpa [#allocation6], 0
    %s16 = scalar_lea.sflag [#allocation6], 1
    %17 = vsyncpa %s16, 0
    loop: start=0, step=1, limit=10
    $region2: #{tpu_custom_call.1} parent=1 // loop_pre_header
      _
    $region3: #{tpu_custom_call.1} parent=1 // loop_header
      %s19 = sphi 0, %s23
      %p20 = scmp.ge.s32.totalorder %s19, 10
      %s26 = sphi 0, %s38
      %s27 = sphi 0, %s34
      %s28 = sphi 0, %s26
      %s29 = sphi 0, %s27
      %s30 = sphi 0, %s28
      %s31 = sphi 0, %s29
      %s41 = sphi 0, %s43
      %s44 = sphi 0, %s41
      %s45 = sphi 0, %s44
      %s61 = sphi 0, %s45
      %s67 = sphi 0, %s69
      %s70 = sphi 0, %s67
      %s71 = sphi 0, %s70
      %s87 = sphi 0, %s71
      %s93 = sphi 0, %s95
      %s96 = sphi 0, %s93
      %s97 = sphi 0, %s96
      %s113 = sphi 0, %s97
      %s119 = sphi 0, %s121
      %s122 = sphi 0, %s119
      %s123 = sphi 0, %s122
      %s139 = sphi 0, %s123
      %s143 = sphi 0, %s143
      %s145 = sphi 0, %s143
      %s146 = sphi 0, %s145
      %s160 = sphi 0, %s146
      %s166 = sphi 0, %s168
      %s169 = sphi 0, %s166
      %s170 = sphi 0, %s169
      %s186 = sphi 0, %s170
      %s194 = sphi 0, %s196
      %s197 = sphi 0, %s194
      %s198 = sphi 0, %s197
      %s214 = sphi 0, %s198
    $region4: #{tpu_custom_call.1} parent=1 // loop_header_branch
      %22 = sbr.rel (%p20) target = $region8
    $region5: #{tpu_custom_call.1} parent=1 // loop_body
      %s24 = ssub.s32 %s19, 1
      %s25 = ssub.s32 %s19, 2
      %s32 = sadd.s32 1, %s27
      %p33 = scmp.ge.s32.totalorder %s32, 4
      %s34 = scalar_select %p33, 0, %s32
      %s35 = sadd.s32 1, %s26
      %s36 = scalar_select %p33, %s35, %s26
      %p37 = scmp.ge.s32.totalorder %s36, 2
      %s38 = scalar_select %p37, 0, %s36
      %s39 = ssub.s32 %s26, %s38
      %p40 = scmp.eq.s32.totalorder %s39, 0
      %s42 = sadd.s32 %s41, 1
      %s43 = scalar_select %p40, %s41, %s42
      %p46 = pneg %p40
      %p47 = scmp.eq.s32.totalorder %s19, 7
      %p48 = por %p46, %p47
      %p49 = scmp.ne.s32.totalorder %s41, %s44
      %p50 = scmp.eq.s32.totalorder %s19, 0
      %p51 = por %p49, %p50
      %p52 = scmp.ne.s32.totalorder %s41, %s44
      %p53 = scmp.eq.s32.totalorder %s24, 7
      %p54 = por %p52, %p53
      %p55 = scmp.ne.s32.totalorder %s44, %s45
      %p56 = scmp.eq.s32.totalorder %s24, 0
      %p57 = por %p55, %p56
      %p58 = scmp.ne.s32.totalorder %s44, %s45
      %p59 = scmp.eq.s32.totalorder %s25, 7
      %p60 = por %p58, %p59
      %p62 = scmp.ne.s32.totalorder %s45, %s61
      %p63 = scmp.eq.s32.totalorder %s25, 0
      %p64 = por %p62, %p63
      %s65 = ssub.s32 %s27, %s34
      %p66 = scmp.eq.s32.totalorder %s65, 0
      %s68 = sadd.s32 %s67, 1
      %s69 = scalar_select %p66, %s67, %s68
      %p72 = pneg %p66
      %p73 = scmp.eq.s32.totalorder %s19, 7
      %p74 = por %p72, %p73
      %p75 = scmp.ne.s32.totalorder %s67, %s70
      %p76 = scmp.eq.s32.totalorder %s19, 0
      %p77 = por %p75, %p76
      %p78 = scmp.ne.s32.totalorder %s67, %s70
      %p79 = scmp.eq.s32.totalorder %s24, 7
      %p80 = por %p78, %p79
      %p81 = scmp.ne.s32.totalorder %s70, %s71
      %p82 = scmp.eq.s32.totalorder %s24, 0
      %p83 = por %p81, %p82
      %p84 = scmp.ne.s32.totalorder %s70, %s71
      %p85 = scmp.eq.s32.totalorder %s25, 7
      %p86 = por %p84, %p85
      %p88 = scmp.ne.s32.totalorder %s71, %s87
      %p89 = scmp.eq.s32.totalorder %s25, 0
      %p90 = por %p88, %p89
      %s91 = ssub.s32 %s27, %s34
      %p92 = scmp.eq.s32.totalorder %s91, 0
      %s94 = sadd.s32 %s93, 1
      %s95 = scalar_select %p92, %s93, %s94
      %p98 = pneg %p92
      %p99 = scmp.eq.s32.totalorder %s19, 7
      %p100 = por %p98, %p99
      %p101 = scmp.ne.s32.totalorder %s93, %s96
      %p102 = scmp.eq.s32.totalorder %s19, 0
      %p103 = por %p101, %p102
      %p104 = scmp.ne.s32.totalorder %s93, %s96
      %p105 = scmp.eq.s32.totalorder %s24, 7
      %p106 = por %p104, %p105
      %p107 = scmp.ne.s32.totalorder %s96, %s97
      %p108 = scmp.eq.s32.totalorder %s24, 0
      %p109 = por %p107, %p108
      %p110 = scmp.ne.s32.totalorder %s96, %s97
      %p111 = scmp.eq.s32.totalorder %s25, 7
      %p112 = por %p110, %p111
      %p114 = scmp.ne.s32.totalorder %s97, %s113
      %p115 = scmp.eq.s32.totalorder %s25, 0
      %p116 = por %p114, %p115
      %s117 = ssub.s32 %s27, %s34
      %p118 = scmp.eq.s32.totalorder %s117, 0
      %s120 = sadd.s32 %s119, 1
      %s121 = scalar_select %p118, %s119, %s120
      %p124 = pneg %p118
      %p125 = scmp.eq.s32.totalorder %s19, 7
      %p126 = por %p124, %p125
      %p127 = scmp.ne.s32.totalorder %s119, %s122
      %p128 = scmp.eq.s32.totalorder %s19, 0
      %p129 = por %p127, %p128
      %p130 = scmp.ne.s32.totalorder %s119, %s122
      %p131 = scmp.eq.s32.totalorder %s24, 7
      %p132 = por %p130, %p131
      %p133 = scmp.ne.s32.totalorder %s122, %s123
      %p134 = scmp.eq.s32.totalorder %s24, 0
      %p135 = por %p133, %p134
      %p136 = scmp.ne.s32.totalorder %s122, %s123
      %p137 = scmp.eq.s32.totalorder %s25, 7
      %p138 = por %p136, %p137
      %p140 = scmp.ne.s32.totalorder %s123, %s139
      %p141 = scmp.eq.s32.totalorder %s25, 0
      %p142 = por %p140, %p141
      %s144 = sadd.s32 %s143, 1
      %p147 = scmp.eq.s32.totalorder %s19, 7
      %p148 = scmp.ne.s32.totalorder %s143, %s145
      %p149 = scmp.eq.s32.totalorder %s19, 0
      %p150 = por %p148, %p149
      %p151 = scmp.ne.s32.totalorder %s143, %s145
      %p152 = scmp.eq.s32.totalorder %s24, 7
      %p153 = por %p151, %p152
      %p154 = scmp.ne.s32.totalorder %s145, %s146
      %p155 = scmp.eq.s32.totalorder %s24, 0
      %p156 = por %p154, %p155
      %p157 = scmp.ne.s32.totalorder %s145, %s146
      %p158 = scmp.eq.s32.totalorder %s25, 7
      %p159 = por %p157, %p158
      %p161 = scmp.ne.s32.totalorder %s146, %s160
      %p162 = scmp.eq.s32.totalorder %s25, 0
      %p163 = por %p161, %p162
      %s164 = ssub.s32 %s26, %s38
      %p165 = scmp.eq.s32.totalorder %s164, 0
      %s167 = sadd.s32 %s166, 1
      %s168 = scalar_select %p165, %s166, %s167
      %p171 = pneg %p165
      %p172 = scmp.eq.s32.totalorder %s19, 7
      %p173 = por %p171, %p172
      %p174 = scmp.ne.s32.totalorder %s166, %s169
      %p175 = scmp.eq.s32.totalorder %s19, 0
      %p176 = por %p174, %p175
      %p177 = scmp.ne.s32.totalorder %s166, %s169
      %p178 = scmp.eq.s32.totalorder %s24, 7
      %p179 = por %p177, %p178
      %p180 = scmp.ne.s32.totalorder %s169, %s170
      %p181 = scmp.eq.s32.totalorder %s24, 0
      %p182 = por %p180, %p181
      %p183 = scmp.ne.s32.totalorder %s169, %s170
      %p184 = scmp.eq.s32.totalorder %s25, 7
      %p185 = por %p183, %p184
      %p187 = scmp.ne.s32.totalorder %s170, %s186
      %p188 = scmp.eq.s32.totalorder %s25, 0
      %p189 = por %p187, %p188
      %s190 = ssub.s32 %s26, %s38
      %s191 = ssub.s32 %s27, %s34
      %s192 = sor.u32 %s190, %s191
      %p193 = scmp.eq.s32.totalorder %s192, 0
      %s195 = sadd.s32 %s194, 1
      %s196 = scalar_select %p193, %s194, %s195
      %p199 = pneg %p193
      %p200 = scmp.eq.s32.totalorder %s19, 7
      %p201 = por %p199, %p200
      %p202 = scmp.ne.s32.totalorder %s194, %s197
      %p203 = scmp.eq.s32.totalorder %s19, 0
      %p204 = por %p202, %p203
      %p205 = scmp.ne.s32.totalorder %s194, %s197
      %p206 = scmp.eq.s32.totalorder %s24, 7
      %p207 = por %p205, %p206
      %p208 = scmp.ne.s32.totalorder %s197, %s198
      %p209 = scmp.eq.s32.totalorder %s24, 0
      %p210 = por %p208, %p209
      %p211 = scmp.ne.s32.totalorder %s197, %s198
      %p212 = scmp.eq.s32.totalorder %s25, 7
      %p213 = por %p211, %p212
      %p215 = scmp.ne.s32.totalorder %s198, %s214
      %p216 = scmp.eq.s32.totalorder %s25, 0
      %p217 = por %p215, %p216
      %p218 = scmp.le.s32.totalorder 1, %s19
      %p219 = scmp.lt.s32.totalorder %s19, 9
      %p220 = pnand %p218, %p219
      %p221 = pneg %p220
      // Predicated region
      $region9: #{tpu_custom_call.1} parent=5 // pred_check
        _
      $region10: #{tpu_custom_call.1} parent=5 // pred_check_branch
        %223 = sbr.rel (%p220) target = $region12
      $region11: #{tpu_custom_call.1} parent=5 // pred_region
        %s224 = ssub.s32 %s19, 1
        // Predicated region
        $region13: #{tpu_custom_call.1} parent=11 // pred_check
          %p225 = pneg %p156
        $region14: #{tpu_custom_call.1} parent=11 // pred_check_branch
          %227 = sbr.rel (%p225) target = $region16
        $region15: #{tpu_custom_call.1} parent=11 // pred_region
          _
        $region16: #{tpu_custom_call.1} parent=11 // pred_fallthru
          _
      $region12: #{tpu_custom_call.1} parent=5 // pred_fallthru
        _
      %p228 = scmp.lt.s32.totalorder %s19, 8
      // Predicated region
      $region17: #{tpu_custom_call.1} parent=5 // pred_check
        %p229 = pneg %p228
      $region18: #{tpu_custom_call.1} parent=5 // pred_check_branch
        %231 = sbr.rel (%p229) target = $region20
      $region19: #{tpu_custom_call.1} parent=5 // pred_region
        // Predicated region
        $region21: #{tpu_custom_call.1} parent=19 // pred_check
          %p232 = pneg %p51
        $region22: #{tpu_custom_call.1} parent=19 // pred_check_branch
          %234 = sbr.rel (%p232) target = $region24
        $region23: #{tpu_custom_call.1} parent=19 // pred_region
          %p235 = scmp.lt.s32.totalorder %s26, 1
          %s236 = scalar_select %p235, %s26, 1
          %s237 = smul.addr %s236, 8
          %s238 = scalar_lea.vmem %s0, %s237
        $region24: #{tpu_custom_call.1} parent=19 // pred_fallthru
          _
        // Predicated region
        $region25: #{tpu_custom_call.1} parent=19 // pred_check
          %p239 = pneg %p77
        $region26: #{tpu_custom_call.1} parent=19 // pred_check_branch
          %241 = sbr.rel (%p239) target = $region28
        $region27: #{tpu_custom_call.1} parent=19 // pred_region
          %p242 = scmp.lt.s32.totalorder %s27, 3
          %s243 = scalar_select %p242, %s27, 3
          %s244 = smul.addr %s243, 4
          %s245 = smul.addr %s244, 8
          %s246 = scalar_lea.vmem %s1, %s245
        $region28: #{tpu_custom_call.1} parent=19 // pred_fallthru
          _
        // Predicated region
        $region29: #{tpu_custom_call.1} parent=19 // pred_check
          %p247 = pneg %p103
        $region30: #{tpu_custom_call.1} parent=19 // pred_check_branch
          %249 = sbr.rel (%p247) target = $region32
        $region31: #{tpu_custom_call.1} parent=19 // pred_region
          %p250 = scmp.lt.s32.totalorder %s27, 3
          %s251 = scalar_select %p250, %s27, 3
          %s252 = scalar_lea.vmem %s2, %s251
        $region32: #{tpu_custom_call.1} parent=19 // pred_fallthru
          _
        // Predicated region
        $region33: #{tpu_custom_call.1} parent=19 // pred_check
          %p253 = pneg %p129
        $region34: #{tpu_custom_call.1} parent=19 // pred_check_branch
          %255 = sbr.rel (%p253) target = $region36
        $region35: #{tpu_custom_call.1} parent=19 // pred_region
          %p256 = scmp.lt.s32.totalorder %s27, 3
          %s257 = scalar_select %p256, %s27, 3
          %s258 = smul.addr %s257, 8
          %s259 = scalar_lea.vmem %s3, %s258
        $region36: #{tpu_custom_call.1} parent=19 // pred_fallthru
          _
      $region20: #{tpu_custom_call.1} parent=5 // pred_fallthru
        _
      %p260 = scmp.le.s32.totalorder 1, %s19
      %p261 = scmp.lt.s32.totalorder %s19, 9
      %p262 = pnand %p260, %p261
      %p263 = pneg %p262
      // Predicated region
      $region37: #{tpu_custom_call.1} parent=5 // pred_check
        _
      $region38: #{tpu_custom_call.1} parent=5 // pred_check_branch
        %265 = sbr.rel (%p262) target = $region40
      $region39: #{tpu_custom_call.1} parent=5 // pred_region
        %s266 = ssub.s32 %s19, 1
        %p267 = scmp.lt.s32.totalorder %s28, 1
        %s268 = scalar_select %p267, %s28, 1
        %s269 = smul.addr %s268, 8
        %s270 = scalar_lea.vmem %s0, %s269
        %p271 = pneg %p57
        %p272 = pneg %p54
        %p273 = scmp.lt.s32.totalorder %s29, 3
        %s274 = scalar_select %p273, %s29, 3
        %s275 = smul.addr %s274, 4
        %s276 = smul.addr %s275, 8
        %s277 = scalar_lea.vmem %s1, %s276
        %p278 = pneg %p83
        %p279 = pneg %p80
        %p280 = scmp.lt.s32.totalorder %s29, 3
        %s281 = scalar_select %p280, %s29, 3
        %s282 = scalar_lea.vmem %s2, %s281
        %p283 = pneg %p109
        %p284 = pneg %p106
        %p285 = scmp.lt.s32.totalorder %s29, 3
        %s286 = scalar_select %p285, %s29, 3
        %s287 = smul.addr %s286, 8
        %s288 = scalar_lea.vmem %s3, %s287
        %p289 = pneg %p135
        %p290 = pneg %p132
        %p291 = pneg %p156
        %p292 = pneg %p153
        %p293 = pneg %p182
        %p294 = pneg %p179
        %s295 = sand.u32 %s169, 1
        %s296 = scalar_lea.sflag [#allocation4], %s295
        %s297 = sand.u32 %s169, 1
        %s298 = smul.addr %s297, 8
        %s299 = scalar_lea.vmem [#allocation3], %s298
        %p300 = pneg %p210
        %p301 = pneg %p207
        %s302 = sand.u32 %s197, 1
        %s303 = scalar_lea.sflag [#allocation6], %s302
        %s304 = sand.u32 %s197, 1
        %s305 = smul.addr %s304, 8
        %s306 = scalar_lea.vmem [#allocation5], %s305
        %p307 = scmp.lt.s32.totalorder %s28, 1
        %s308 = scalar_select %p307, %s28, 1
        %s309 = smul.addr %s308, 8
        %s310 = scalar_lea.vmem %s0, %s309
        %p311 = scmp.lt.s32.totalorder %s29, 3
        %s312 = scalar_select %p311, %s29, 3
        %s313 = smul.addr %s312, 4
        %s314 = smul.addr %s313, 8
        %s315 = scalar_lea.vmem %s1, %s314
        %p316 = scmp.lt.s32.totalorder %s29, 3
        %s317 = scalar_select %p316, %s29, 3
        %s318 = scalar_lea.vmem %s2, %s317
        %p319 = scmp.lt.s32.totalorder %s29, 3
        %s320 = scalar_select %p319, %s29, 3
        %s321 = smul.addr %s320, 8
        %s322 = scalar_lea.vmem %s3, %s321
        %p323 = scmp.eq.s32.totalorder %s29, 0
        // Predicated region
        $region41: #{tpu_custom_call.1} parent=39 // pred_check
          %p324 = pneg %p323
        $region42: #{tpu_custom_call.1} parent=39 // pred_check_branch
          %326 = sbr.rel (%p324) target = $region44
        $region43: #{tpu_custom_call.1} parent=39 // pred_region
          %vm327 = vcmask 261120
          %328 = vst.msk [vmem:[#allocation2] sm:$0xff] %vm327, 0.0
        $region44: #{tpu_custom_call.1} parent=39 // pred_fallthru
          _
        %v329 = vld [vmem:[%s310] sm:$0xff]
        %v330 = vld [vmem:[%s315] sm:$0xff]
        %v331 = vld [vmem:[%s315 + $0x8] sm:$0xff]
        %v332 = vld [vmem:[%s315 + $0x10] sm:$0xff]
        %v333 = vld [vmem:[%s315 + $0x18] sm:$0xff]
        %v334 = vld [vmem:[%s318] sm:$0x1]
        %v336 = vlaneseq
        %v337 = vshrl.u32 %v336, 7
        %v338 = vsub.s32 0, %v337
        %v339 = vrot.slane %v334, %v338
        %vm341 = vcmask 261120
        %v343 = vsel %vm341, %v329, 0
        %345 = vmatprep.subr.mxu0 0.0
        %346 = vmatpush1.msra.mxu0 %v330
        %347 = vmatprep.subr.mxu0 0.0
        %348 = vmatpush1.msra.mxu0 %v331
        %349 = vmatprep.subr.mxu0 0.0
        %350 = vmatpush1.msra.mxu0 %v332
        %351 = vmatprep.subr.mxu0 0.0
        %352 = vmatpush1.msra.mxu0 %v333
        %353 = vmatprep.subr.mxu0 0.0
        %354 = vmatpush1.msra.mxu0 0.0
        %355 = vmatprep.subr.mxu0 0.0
        %356 = vmatpush1.msra.mxu0 0.0
        %357 = vmatprep.subr.mxu0 0.0
        %358 = vmatpush1.msra.mxu0 0.0
        %359 = vmatprep.subr.mxu0 0.0
        %360 = vmatpush1.msra.mxu0 0.0
        %361 = vmatprep.subr.mxu0 0.0
        %362 = vmatpush1.msra.mxu0 0.0
        %363 = vmatprep.subr.mxu0 0.0
        %364 = vmatpush1.msra.mxu0 0.0
        %365 = vmatprep.subr.mxu0 0.0
        %366 = vmatpush1.msra.mxu0 0.0
        %367 = vmatprep.subr.mxu0 0.0
        %368 = vmatpush1.msra.mxu0 0.0
        %369 = vmatprep.subr.mxu0 0.0
        %370 = vmatpush1.msra.mxu0 0.0
        %371 = vmatprep.subr.mxu0 0.0
        %372 = vmatpush1.msra.mxu0 0.0
        %373 = vmatprep.subr.mxu0 0.0
        %374 = vmatpush1.msra.mxu0 0.0
        %375 = vmatprep.subr.mxu0 0.0
        %376 = vmatpush1.msra.mxu0 0.0
        %377 = vmatprep.subr.mxu0 0.0
        %378 = vmatpush1.msra.mxu0 0.0
        %379 = vmatprep.subr.mxu0 0.0
        %380 = vmatpush1.msra.mxu0 0.0
        %381 = vmatprep.subr.mxu0 0.0
        %382 = vmatpush1.msra.mxu0 0.0
        %383 = vmatprep.subr.mxu0 0.0
        %384 = vmatpush1.msra.mxu0 0.0
        %385 = vmatprep.subr.mxu0 0.0
        %386 = vmatpush1.msra.mxu0 0.0
        %387 = vmatprep.subr.mxu0 0.0
        %388 = vmatpush1.msra.mxu0 0.0
        %389 = vmatprep.subr.mxu0 0.0
        %390 = vmatpush1.msra.mxu0 0.0
        %391 = vmatprep.subr.mxu0 0.0
        %392 = vmatpush1.msra.mxu0 0.0
        %393 = vmatprep.subr.mxu0 0.0
        %394 = vmatpush1.msra.mxu0 0.0
        %395 = vmatprep.subr.mxu0 0.0
        %396 = vmatpush1.msra.mxu0 0.0
        %397 = vmatprep.subr.mxu0 0.0
        %398 = vmatpush1.msra.mxu0 0.0
        %399 = vmatprep.subr.mxu0 0.0
        %400 = vmatpush1.msra.mxu0 0.0
        %401 = vmatprep.subr.mxu0 0.0
        %402 = vmatpush1.msra.mxu0 0.0
        %403 = vmatprep.subr.mxu0 0.0
        %404 = vmatpush1.msra.mxu0 0.0
        %405 = vmatprep.subr.mxu0 0.0
        %406 = vmatpush1.msra.mxu0 0.0
        %407 = vmatprep.subr.mxu0 0.0
        %408 = vmatpush1.msra.mxu0 0.0
        %409 = vmatprep.mubr.f32.mxu0 0.0
        %410 = vmatmul.mubr.f32.gmra.mrb[0].mxu0 %v343
        %v411 = vpop.f32.mrb[0].mxu0
        %v412 = vadd.f32 %v339, %v411
        %v413 = vpop.f32.mrb[0].mxu0
        %414 = vdwg.mxu0
        %416 = vrot.lane.b32.xlu0 %v412, 120
        %v417 = vpop.permute.xlu0 %416
        %vm418 = vcmask 64512
        %v419 = vsel %vm418, %v412, 0
        %v421 = vsel %vm418, %v417, 0
        %423 = vmatprep.subr.mxu0 0.0
        %424 = vmatpush1.xpose.msra.mxu0 %v421
        %425 = vmatprep.subr.mxu0 0.0
        %426 = vmatpush1.xpose.msra.mxu0 0.0
        %427 = vmatprep.subr.mxu0 0.0
        %428 = vmatpush1.xpose.msra.mxu0 0.0
        %429 = vmatprep.subr.mxu0 0.0
        %430 = vmatpush1.xpose.msra.mxu0 0.0
        %431 = vmatprep.subr.mxu0 0.0
        %432 = vmatpush1.xpose.msra.mxu0 0.0
        %433 = vmatprep.subr.mxu0 0.0
        %434 = vmatpush1.xpose.msra.mxu0 0.0
        %435 = vmatprep.subr.mxu0 0.0
        %436 = vmatpush1.xpose.msra.mxu0 0.0
        %437 = vmatprep.subr.mxu0 0.0
        %438 = vmatpush1.xpose.msra.mxu0 0.0
        %439 = vmatprep.subr.mxu0 0.0
        %440 = vmatpush1.xpose.msra.mxu0 0.0
        %441 = vmatprep.subr.mxu0 0.0
        %442 = vmatpush1.xpose.msra.mxu0 0.0
        %443 = vmatprep.subr.mxu0 0.0
        %444 = vmatpush1.xpose.msra.mxu0 0.0
        %445 = vmatprep.subr.mxu0 0.0
        %446 = vmatpush1.xpose.msra.mxu0 0.0
        %447 = vmatprep.subr.mxu0 0.0
        %448 = vmatpush1.xpose.msra.mxu0 0.0
        %449 = vmatprep.subr.mxu0 0.0
        %450 = vmatpush1.xpose.msra.mxu0 0.0
        %451 = vmatprep.subr.mxu0 0.0
        %452 = vmatpush1.xpose.msra.mxu0 0.0
        %453 = vmatprep.subr.mxu0 0.0
        %454 = vmatpush1.xpose.msra.mxu0 0.0
        %455 = vmatprep.subr.mxu0 0.0
        %456 = vmatpush1.xpose.msra.mxu0 0.0
        %457 = vmatprep.subr.mxu0 0.0
        %458 = vmatpush1.xpose.msra.mxu0 0.0
        %459 = vmatprep.subr.mxu0 0.0
        %460 = vmatpush1.xpose.msra.mxu0 0.0
        %461 = vmatprep.subr.mxu0 0.0
        %462 = vmatpush1.xpose.msra.mxu0 0.0
        %463 = vmatprep.subr.mxu0 0.0
        %464 = vmatpush1.xpose.msra.mxu0 0.0
        %465 = vmatprep.subr.mxu0 0.0
        %466 = vmatpush1.xpose.msra.mxu0 0.0
        %467 = vmatprep.subr.mxu0 0.0
        %468 = vmatpush1.xpose.msra.mxu0 0.0
        %469 = vmatprep.subr.mxu0 0.0
        %470 = vmatpush1.xpose.msra.mxu0 0.0
        %471 = vmatprep.subr.mxu0 0.0
        %472 = vmatpush1.xpose.msra.mxu0 0.0
        %473 = vmatprep.subr.mxu0 0.0
        %474 = vmatpush1.xpose.msra.mxu0 0.0
        %475 = vmatprep.subr.mxu0 0.0
        %476 = vmatpush1.xpose.msra.mxu0 0.0
        %477 = vmatprep.subr.mxu0 0.0
        %478 = vmatpush1.xpose.msra.mxu0 0.0
        %479 = vmatprep.subr.mxu0 0.0
        %480 = vmatpush1.xpose.msra.mxu0 0.0
        %481 = vmatprep.subr.mxu0 0.0
        %482 = vmatpush1.xpose.msra.mxu0 0.0
        %483 = vmatprep.subr.mxu0 0.0
        %484 = vmatpush1.xpose.msra.mxu0 0.0
        %485 = vmatprep.subr.mxu0 0.0
        %486 = vmatpush1.xpose.msra.mxu0 0.0
        %487 = vmatprep.mubr.f32.mxu0 0.0
        %488 = vmatmul.mubr.f32.gmra.mrb[0].mxu0 %v419
        %v489 = vpop.f32.mrb[0].mxu0
        %v490 = vadd.f32 0.0, %v489
        %v491 = vpop.f32.mrb[0].mxu0
        %492 = vdwg.mxu0
        %v493 = vsel %vm418, %v490, -inf
        %494 = vmax.xlane.f32.xlu0 %v493
        %v495 = vpop.xlane.xlu0 %494
        %v496 = vsub.f32 %v490, %v495
        %v497 = vmul.f32 %v496, 1.442695
        %v498 = vpow.pop %v497
        %v499 = vsel %vm418, %v498, 0.0
        %500 = vadd.xlane.f32.xlu0 %v499
        %v501 = vpop.xlane.xlu0 %500
        %v502 = vrcp.pop %v501
        %v503 = vmul.f32 %v498, %v502
        %504 = vst.msk [vmem:[%s306] sm:$0xff] %vm418, %v503
        %505 = vrot.lane.b32.xlu0 %v412, 112
        %v506 = vpop.permute.xlu0 %505
        %v509 = vsel %vm418, %v503, 0
        %511 = vmatprep.subr.mxu0 0.0
        %512 = vmatpush1.msra.mxu0 %v506
        %513 = vmatprep.subr.mxu0 0.0
        %514 = vmatpush1.msra.mxu0 0.0
        %515 = vmatprep.subr.mxu0 0.0
        %516 = vmatpush1.msra.mxu0 0.0
        %517 = vmatprep.subr.mxu0 0.0
        %518 = vmatpush1.msra.mxu0 0.0
        %519 = vmatprep.subr.mxu0 0.0
        %520 = vmatpush1.msra.mxu0 0.0
        %521 = vmatprep.subr.mxu0 0.0
        %522 = vmatpush1.msra.mxu0 0.0
        %523 = vmatprep.subr.mxu0 0.0
        %524 = vmatpush1.msra.mxu0 0.0
        %525 = vmatprep.subr.mxu0 0.0
        %526 = vmatpush1.msra.mxu0 0.0
        %527 = vmatprep.subr.mxu0 0.0
        %528 = vmatpush1.msra.mxu0 0.0
        %529 = vmatprep.subr.mxu0 0.0
        %530 = vmatpush1.msra.mxu0 0.0
        %531 = vmatprep.subr.mxu0 0.0
        %532 = vmatpush1.msra.mxu0 0.0
        %533 = vmatprep.subr.mxu0 0.0
        %534 = vmatpush1.msra.mxu0 0.0
        %535 = vmatprep.subr.mxu0 0.0
        %536 = vmatpush1.msra.mxu0 0.0
        %537 = vmatprep.subr.mxu0 0.0
        %538 = vmatpush1.msra.mxu0 0.0
        %539 = vmatprep.subr.mxu0 0.0
        %540 = vmatpush1.msra.mxu0 0.0
        %541 = vmatprep.subr.mxu0 0.0
        %542 = vmatpush1.msra.mxu0 0.0
        %543 = vmatprep.subr.mxu0 0.0
        %544 = vmatpush1.msra.mxu0 0.0
        %545 = vmatprep.subr.mxu0 0.0
        %546 = vmatpush1.msra.mxu0 0.0
        %547 = vmatprep.subr.mxu0 0.0
        %548 = vmatpush1.msra.mxu0 0.0
        %549 = vmatprep.subr.mxu0 0.0
        %550 = vmatpush1.msra.mxu0 0.0
        %551 = vmatprep.subr.mxu0 0.0
        %552 = vmatpush1.msra.mxu0 0.0
        %553 = vmatprep.subr.mxu0 0.0
        %554 = vmatpush1.msra.mxu0 0.0
        %555 = vmatprep.subr.mxu0 0.0
        %556 = vmatpush1.msra.mxu0 0.0
        %557 = vmatprep.subr.mxu0 0.0
        %558 = vmatpush1.msra.mxu0 0.0
        %559 = vmatprep.subr.mxu0 0.0
        %560 = vmatpush1.msra.mxu0 0.0
        %561 = vmatprep.subr.mxu0 0.0
        %562 = vmatpush1.msra.mxu0 0.0
        %563 = vmatprep.subr.mxu0 0.0
        %564 = vmatpush1.msra.mxu0 0.0
        %565 = vmatprep.subr.mxu0 0.0
        %566 = vmatpush1.msra.mxu0 0.0
        %567 = vmatprep.subr.mxu0 0.0
        %568 = vmatpush1.msra.mxu0 0.0
        %569 = vmatprep.subr.mxu0 0.0
        %570 = vmatpush1.msra.mxu0 0.0
        %571 = vmatprep.subr.mxu0 0.0
        %572 = vmatpush1.msra.mxu0 0.0
        %573 = vmatprep.subr.mxu0 0.0
        %574 = vmatpush1.msra.mxu0 0.0
        %575 = vmatprep.mubr.f32.mxu0 0.0
        %576 = vmatmul.mubr.f32.gmra.mrb[0].mxu0 %v509
        %v577 = vpop.f32.mrb[0].mxu0
        %v578 = vadd.f32 0.0, %v577
        %v579 = vpop.f32.mrb[0].mxu0
        %580 = vdwg.mxu0
        %v581 = vld [vmem:[#allocation2] sm:$0xff]
        %v582 = vld [vmem:[%s322] sm:$0xff]
        %v584 = vsel %vm418, %v578, 0
        %586 = vmatprep.subr.mxu0 0.0
        %587 = vmatpush1.msra.mxu0 %v582
        %588 = vmatprep.subr.mxu0 0.0
        %589 = vmatpush1.msra.mxu0 0.0
        %590 = vmatprep.subr.mxu0 0.0
        %591 = vmatpush1.msra.mxu0 0.0
        %592 = vmatprep.subr.mxu0 0.0
        %593 = vmatpush1.msra.mxu0 0.0
        %594 = vmatprep.subr.mxu0 0.0
        %595 = vmatpush1.msra.mxu0 0.0
        %596 = vmatprep.subr.mxu0 0.0
        %597 = vmatpush1.msra.mxu0 0.0
        %598 = vmatprep.subr.mxu0 0.0
        %599 = vmatpush1.msra.mxu0 0.0
        %600 = vmatprep.subr.mxu0 0.0
        %601 = vmatpush1.msra.mxu0 0.0
        %602 = vmatprep.subr.mxu0 0.0
        %603 = vmatpush1.msra.mxu0 0.0
        %604 = vmatprep.subr.mxu0 0.0
        %605 = vmatpush1.msra.mxu0 0.0
        %606 = vmatprep.subr.mxu0 0.0
        %607 = vmatpush1.msra.mxu0 0.0
        %608 = vmatprep.subr.mxu0 0.0
        %609 = vmatpush1.msra.mxu0 0.0
        %610 = vmatprep.subr.mxu0 0.0
        %611 = vmatpush1.msra.mxu0 0.0
        %612 = vmatprep.subr.mxu0 0.0
        %613 = vmatpush1.msra.mxu0 0.0
        %614 = vmatprep.subr.mxu0 0.0
        %615 = vmatpush1.msra.mxu0 0.0
        %616 = vmatprep.subr.mxu0 0.0
        %617 = vmatpush1.msra.mxu0 0.0
        %618 = vmatprep.subr.mxu0 0.0
        %619 = vmatpush1.msra.mxu0 0.0
        %620 = vmatprep.subr.mxu0 0.0
        %621 = vmatpush1.msra.mxu0 0.0
        %622 = vmatprep.subr.mxu0 0.0
        %623 = vmatpush1.msra.mxu0 0.0
        %624 = vmatprep.subr.mxu0 0.0
        %625 = vmatpush1.msra.mxu0 0.0
        %626 = vmatprep.subr.mxu0 0.0
        %627 = vmatpush1.msra.mxu0 0.0
        %628 = vmatprep.subr.mxu0 0.0
        %629 = vmatpush1.msra.mxu0 0.0
        %630 = vmatprep.subr.mxu0 0.0
        %631 = vmatpush1.msra.mxu0 0.0
        %632 = vmatprep.subr.mxu0 0.0
        %633 = vmatpush1.msra.mxu0 0.0
        %634 = vmatprep.subr.mxu0 0.0
        %635 = vmatpush1.msra.mxu0 0.0
        %636 = vmatprep.subr.mxu0 0.0
        %637 = vmatpush1.msra.mxu0 0.0
        %638 = vmatprep.subr.mxu0 0.0
        %639 = vmatpush1.msra.mxu0 0.0
        %640 = vmatprep.subr.mxu0 0.0
        %641 = vmatpush1.msra.mxu0 0.0
        %642 = vmatprep.subr.mxu0 0.0
        %643 = vmatpush1.msra.mxu0 0.0
        %644 = vmatprep.subr.mxu0 0.0
        %645 = vmatpush1.msra.mxu0 0.0
        %646 = vmatprep.subr.mxu0 0.0
        %647 = vmatpush1.msra.mxu0 0.0
        %648 = vmatprep.subr.mxu0 0.0
        %649 = vmatpush1.msra.mxu0 0.0
        %650 = vmatprep.mubr.f32.mxu0 0.0
        %651 = vmatmul.mubr.f32.gmra.mrb[0].mxu0 %v584
        %v652 = vpop.f32.mrb[0].mxu0
        %v653 = vadd.f32 0.0, %v652
        %v654 = vpop.f32.mrb[0].mxu0
        %655 = vdwg.mxu0
        %v656 = vadd.f32 %v581, %v653
        %657 = vst.msk [vmem:[#allocation2] sm:$0xff] %vm341, %v656
        %p658 = scmp.eq.s32.totalorder %s29, 3
        // Predicated region
        $region45: #{tpu_custom_call.1} parent=39 // pred_check
          %p659 = pneg %p658
        $region46: #{tpu_custom_call.1} parent=39 // pred_check_branch
          %661 = sbr.rel (%p659) target = $region48
        $region47: #{tpu_custom_call.1} parent=39 // pred_region
          %v662 = vld [vmem:[#allocation2] sm:$0xff]
          %v663 = vld [vmem:[%s4] sm:$0x1]
          %v665 = vlaneseq
          %v666 = vshrl.u32 %v665, 7
          %v667 = vsub.s32 0, %v666
          %v668 = vrot.slane %v663, %v667
          %v670 = vadd.f32 %v662, %v668
          %671 = vst.msk [vmem:[%s299] sm:$0xff] %vm341, %v670
        $region48: #{tpu_custom_call.1} parent=39 // pred_fallthru
          _
        %s672 = sand.u32 %s169, 1
        %s673 = scalar_lea.sflag [#allocation4], %s672
        %s674 = sand.u32 %s169, 1
        %s675 = smul.addr %s674, 8
        %s676 = scalar_lea.vmem [#allocation3], %s675
        %s677 = sand.u32 %s197, 1
        %s678 = scalar_lea.sflag [#allocation6], %s677
        %s679 = sand.u32 %s197, 1
        %s680 = smul.addr %s679, 8
        %s681 = scalar_lea.vmem [#allocation5], %s680
        // Predicated region
        $region49: #{tpu_custom_call.1} parent=39 // pred_check
          %p682 = pneg %p179
        $region50: #{tpu_custom_call.1} parent=39 // pred_check_branch
          %684 = sbr.rel (%p682) target = $region52
        $region51: #{tpu_custom_call.1} parent=39 // pred_region
          %s686 = ssub.s32 128, 128
          %687 = vsyncadd %s673, %s686
          %s688 = smul.addr %s28, 128
          %s689 = scalar_lea.hbm %s5, %s688
          %s691 = sshll.u32 %s676, 4
          %s692 = int_to_ptr.vmem [resolvable:$true] %s691
          %694 = dma.vmem_to_hbm [thread:$0]  %s692, 128, %s689, %s673
        $region52: #{tpu_custom_call.1} parent=39 // pred_fallthru
          _
        // Predicated region
        $region53: #{tpu_custom_call.1} parent=39 // pred_check
          %p695 = pneg %p207
        $region54: #{tpu_custom_call.1} parent=39 // pred_check_branch
          %697 = sbr.rel (%p695) target = $region56
        $region55: #{tpu_custom_call.1} parent=39 // pred_region
          %s699 = ssub.s32 128, 128
          %700 = vsyncadd %s678, %s699
          %s701 = smul.addr %s28, 4
          %s702 = sadd.s32 %s29, %s701
          %s703 = smul.addr %s702, 128
          %s704 = scalar_lea.hbm %s6, %s703
          %s706 = sshll.u32 %s681, 4
          %s707 = int_to_ptr.vmem [resolvable:$true] %s706
          %709 = dma.vmem_to_hbm [thread:$0]  %s707, 128, %s704, %s678
        $region56: #{tpu_custom_call.1} parent=39 // pred_fallthru
          _
      $region40: #{tpu_custom_call.1} parent=5 // pred_fallthru
        _
      %p710 = scmp.le.s32.totalorder 2, %s19
      // Predicated region
      $region57: #{tpu_custom_call.1} parent=5 // pred_check
        %p711 = pneg %p710
      $region58: #{tpu_custom_call.1} parent=5 // pred_check_branch
        %713 = sbr.rel (%p711) target = $region60
      $region59: #{tpu_custom_call.1} parent=5 // pred_region
        %s714 = ssub.s32 %s19, 2
        // Predicated region
        $region61: #{tpu_custom_call.1} parent=59 // pred_check
          %p715 = pneg %p185
        $region62: #{tpu_custom_call.1} parent=59 // pred_check_branch
          %717 = sbr.rel (%p715) target = $region64
        $region63: #{tpu_custom_call.1} parent=59 // pred_region
          %s718 = sand.u32 %s170, 1
          %s719 = scalar_lea.sflag [#allocation4], %s718
          %s720 = sand.u32 %s170, 1
          %s721 = smul.addr %s720, 8
          %s722 = scalar_lea.vmem [#allocation3], %s721
          %723 = dma.done %s719, 128
        $region64: #{tpu_custom_call.1} parent=59 // pred_fallthru
          _
        // Predicated region
        $region65: #{tpu_custom_call.1} parent=59 // pred_check
          %p724 = pneg %p213
        $region66: #{tpu_custom_call.1} parent=59 // pred_check_branch
          %726 = sbr.rel (%p724) target = $region68
        $region67: #{tpu_custom_call.1} parent=59 // pred_region
          %s727 = sand.u32 %s198, 1
          %s728 = scalar_lea.sflag [#allocation6], %s727
          %s729 = sand.u32 %s198, 1
          %s730 = smul.addr %s729, 8
          %s731 = scalar_lea.vmem [#allocation5], %s730
          %732 = dma.done %s728, 128
        $region68: #{tpu_custom_call.1} parent=59 // pred_fallthru
          _
      $region60: #{tpu_custom_call.1} parent=5 // pred_fallthru
        _
    $region6: #{tpu_custom_call.1} parent=1 // loop_footer
      %s23 = sadd.s32 1, %s19
    $region7: #{tpu_custom_call.1} parent=1 // loop_footer_branch
      %18 = sbr.rel target = $region3
    $region8: #{tpu_custom_call.1} parent=1 // loop_exit
      _
    %733 = vsyncpa [#allocation4], 1
    %s734 = scalar_lea.sflag [#allocation4], 1
    %735 = vsyncpa %s734, 1
    %736 = vsyncpa [#allocation6], 1
    %s737 = scalar_lea.sflag [#allocation6], 1
    %738 = vsyncpa %s737, 1

</llo_original>
